<compile_context>
chip_gen: v7x
topology: tpu7x:2x2x1
jax: 0.10.0
libtpu: 0.0.40
codegen_flags: <defaults>
</compile_context>

<pallas_src>
import jax
import jax.numpy as jnp
from jax.experimental import pallas as pl
from jax.experimental.pallas import tpu as pltpu

_MiB = 2 ** 20


def _round_up(x, m):
    return (x + m - 1) // m * m


# ----------------------------------------------------------------------------
# Kernels: out = (x @ W1) @ W2 + b_eff, with b_eff = b1 @ W2 + b2 (dropout=id).
# ----------------------------------------------------------------------------
def _mlp_kernel_acc_in_out(x_ref, w1_ref, w2_ref, beff_ref, o_ref):
    """f32 output: accumulate the hidden-axis reduction directly in o_ref."""
    k = pl.program_id(1)

    @pl.when(k == 0)
    def _():
        o_ref[...] = jnp.zeros_like(o_ref)

    xb = x_ref[...].astype(w1_ref.dtype)                   # bf16 MXU operand
    h = jnp.dot(xb, w1_ref[...], preferred_element_type=jnp.float32)
    # Dropout (eval mode) == identity; b1 folded into beff outside the kernel.
    o_ref[...] += jnp.dot(h.astype(w2_ref.dtype), w2_ref[...],
                          preferred_element_type=jnp.float32)

    @pl.when(k == pl.num_programs(1) - 1)
    def _():
        o_ref[...] = o_ref[...] + beff_ref[...]


def _mlp_kernel_scratch(x_ref, w1_ref, w2_ref, beff_ref, o_ref, acc_ref):
    """Non-f32 output: f32 VMEM accumulator, cast once at the finalize step."""
    k = pl.program_id(1)

    @pl.when(k == 0)
    def _():
        acc_ref[...] = jnp.zeros_like(acc_ref)

    xb = x_ref[...].astype(w1_ref.dtype)
    h = jnp.dot(xb, w1_ref[...], preferred_element_type=jnp.float32)
    acc_ref[...] += jnp.dot(h.astype(w2_ref.dtype), w2_ref[...],
                            preferred_element_type=jnp.float32)

    @pl.when(k == pl.num_programs(1) - 1)
    def _():
        o_ref[...] = (acc_ref[...] + beff_ref[...]).astype(o_ref.dtype)


# ----------------------------------------------------------------------------
# Wrapper-side helpers.
# ----------------------------------------------------------------------------
def _vmem_capacity_bytes():
    """Physical VMEM per TensorCore; conservative (v7x) fallback if unknown."""
    try:
        return int(pltpu.get_tpu_info().vmem_capacity_bytes)
    except Exception:
        return 64 * _MiB


def _select_tiles(M, E_pad, F_pad, x_bytes, w_bytes, out_bytes, acc_in_out,
                  vmem_cap):
    """Pick (tm, tf) maximizing arithmetic intensity within the VMEM budget."""
    if vmem_cap >= 96 * _MiB:
        # v5e / v6e: 128 MiB physical VMEM -> large row tiles + hidden chunks.
        tm_target, tf_target = 512, 1024
        limit_cap = max(32 * _MiB, min(100 * _MiB, vmem_cap - 16 * _MiB))
    else:
        # v7x: 64 MiB per TensorCore -> leave headroom below the physical cap.
        tm_target, tf_target = 512, 256
        limit_cap = max(32 * _MiB, min(56 * _MiB, vmem_cap * 7 // 8))

    tm_full = _round_up(M, 8)
    tm_cands, t = [], tm_target
    while t >= 8:
        tm_cands.append(min(t, tm_full))
        t //= 2
    tm_cands = sorted(set(tm_cands), reverse=True)

    # tf must divide F_pad (no hidden-axis over-padding) and be lane-dense.
    tf_cands = [d for d in range(F_pad, 0, -128)
                if F_pad % d == 0 and d <= tf_target] or [128]

    def need(tm, tf):
        n = (2 * tm * E_pad * x_bytes          # x row tile (double-buffered)
             + 2 * E_pad * tf * w_bytes        # W1 chunk  (double-buffered)
             + 2 * tf * E_pad * w_bytes        # W2 chunk  (double-buffered)
             + 2 * E_pad * 4                   # effective bias (f32)
             + 2 * tm * E_pad * out_bytes      # output tile
             + tm * tf * (4 + w_bytes)         # h (f32) + bf16 copy of h
             + tm * E_pad * w_bytes)           # in-kernel bf16 cast of x
        if not acc_in_out:
            n += tm * E_pad * 4                # f32 accumulator scratch
        return n

    for tm in tm_cands:
        for tf in tf_cands:
            if need(tm, tf) + 2 * _MiB <= limit_cap:
                return tm, tf, need(tm, tf), limit_cap
    tm, tf = tm_cands[-1], tf_cands[-1]
    return tm, tf, need(tm, tf), limit_cap


def prepare_params(w1, b1, w2, b2, compute_dtype=jnp.bfloat16):
    """One-time weight prep: cast to bf16, pad only if E/F are not 128-aligned,
    and fold b1 into an effective bias (valid because dropout is identity)."""
    E, F = w1.shape
    assert w2.shape == (F, E) and b1.shape == (F,) and b2.shape == (E,)
    E_pad, F_pad = _round_up(E, 128), _round_up(F, 128)

    if (E_pad, F_pad) == (E, F):
        w1_p = w1.astype(compute_dtype)
        w2_p = w2.astype(compute_dtype)
    else:
        w1_p = jnp.zeros((E_pad, F_pad), compute_dtype).at[:E, :F].set(
            w1.astype(compute_dtype))
        w2_p = jnp.zeros((F_pad, E_pad), compute_dtype).at[:F, :E].set(
            w2.astype(compute_dtype))

    # b_eff = b1 @ W2 + b2, computed once in f32 (better precision than
    # pushing b1 through the bf16 h downcast every step).
    b_eff = (b1.astype(jnp.float32) @ w2.astype(jnp.float32)
             + b2.astype(jnp.float32))
    beff_p = jnp.zeros((1, E_pad), jnp.float32).at[0, :E].set(b_eff)

    return {"w1": w1_p, "w2": w2_p, "beff": beff_p, "E": E, "F": F,
            "E_pad": E_pad, "F_pad": F_pad}


def attention_after_linear(x, params, *, core_parallel=False):
    """x: [B, S, E]; params from prepare_params()."""
    B, S, E = x.shape
    assert E == params["E"]
    E_pad, F_pad = params["E_pad"], params["F_pad"]
    w1_p, w2_p, beff_p = params["w1"], params["w2"], params["beff"]

    M = B * S
    x_bytes = jnp.dtype(x.dtype).itemsize
    w_bytes = jnp.dtype(w1_p.dtype).itemsize
    out_dtype = x.dtype
    out_bytes = jnp.dtype(out_dtype).itemsize
    acc_in_out = jnp.dtype(out_dtype) == jnp.dtype(jnp.float32)

    vmem_cap = _vmem_capacity_bytes()
    tm, tf, vneed, limit_cap = _select_tiles(
        M, E_pad, F_pad, x_bytes, w_bytes, out_bytes, acc_in_out, vmem_cap)
    M_pad = _round_up(M, tm)

    # Pad x only if needed; keep it in its native dtype (cast to bf16 in-kernel).
    x2 = x.reshape(M, E)
    if (M_pad, E_pad) == (M, E):
        x_p = x2
    else:
        x_p = jnp.zeros((M_pad, E_pad), x.dtype).at[:M, :E].set(x2)

    grid = (M_pad // tm, F_pad // tf)
    vmem_limit = int(min(limit_cap, max(32 * _MiB, vneed + 4 * _MiB)))

    # Cost estimate: weights are re-streamed once per row tile.
    n_row = grid[0]
    flops = 4 * M_pad * E_pad * F_pad
    bytes_accessed = int(M_pad * E_pad * x_bytes
                         + n_row * 2 * E_pad * F_pad * w_bytes
                         + n_row * E_pad * 4
                         + M_pad * E_pad * out_bytes)

    # Row axis: parallel (megacore sharding); on v7x prefer CORE_PARALLEL when
    # there are >= 2 row tiles so both TensorCores get work.
    row_sem = "parallel"
    if core_parallel and grid[0] >= 2:
        row_sem = getattr(pltpu, "CORE_PARALLEL", "parallel")

    kernel = _mlp_kernel_acc_in_out if acc_in_out else _mlp_kernel_scratch
    scratch_shapes = [] if acc_in_out else [pltpu.VMEM((tm, E_pad), jnp.float32)]

    out_p = pl.pallas_call(
        kernel,
        out_shape=jax.ShapeDtypeStruct((M_pad, E_pad), out_dtype),
        grid_spec=pltpu.PrefetchScalarGridSpec(
            num_scalar_prefetch=0,
            grid=grid,
            in_specs=[
                pl.BlockSpec((tm, E_pad), lambda i, k: (i, 0)),   # x rows
                pl.BlockSpec((E_pad, tf), lambda i, k: (0, k)),   # W1 chunk
                pl.BlockSpec((tf, E_pad), lambda i, k: (k, 0)),   # W2 chunk
                pl.BlockSpec((1, E_pad),  lambda i, k: (0, 0)),   # b_eff
            ],
            out_specs=pl.BlockSpec((tm, E_pad), lambda i, k: (i, 0)),
            scratch_shapes=scratch_shapes,
        ),
        compiler_params=pltpu.CompilerParams(
            dimension_semantics=(row_sem, "arbitrary"),
            vmem_limit_bytes=vmem_limit),
        cost_estimate=pl.CostEstimate(flops=flops, transcendentals=0,
                                      bytes_accessed=bytes_accessed),
    )(x_p, w1_p, w2_p, beff_p)

    return out_p[:M, :E].reshape(B, S, E)


def reference(x, w1, b1, w2, b2):
    h = jnp.einsum("bse,ef->bsf", x, w1) + b1
    return jnp.einsum("bsf,fe->bse", h, w2) + b2


if __name__ == "__main__":
    # Small shapes consistent with the module: batch=2, seq=8, embedding_dim=32, d_ff=64.
    B, S, E, F = 2, 8, 32, 64
    key = jax.random.PRNGKey(0)
    kx, k1, k2, k3, k4 = jax.random.split(key, 5)

    x = jax.random.normal(kx, (B, S, E), dtype=jnp.float32)
    # Deterministic parameter init (uniform, roughly matching nn.Linear scale).
    bound1 = 1.0 / (E ** 0.5)
    bound2 = 1.0 / (F ** 0.5)
    w1 = jax.random.uniform(k1, (E, F), jnp.float32, -bound1, bound1)
    b1 = jax.random.uniform(k2, (F,), jnp.float32, -bound1, bound1)
    w2 = jax.random.uniform(k3, (F, E), jnp.float32, -bound2, bound2)
    b2 = jax.random.uniform(k4, (E,), jnp.float32, -bound2, bound2)

    params = prepare_params(w1, b1, w2, b2)          # one-time cast/pad/fold
    out = attention_after_linear(x, params)
    out = jax.block_until_ready(out)

    ref = reference(x, w1, b1, w2, b2)
    assert out.shape == (B, S, E)
    # bf16 MXU operands with f32 accumulation -> compare loosely vs fp32 ref.
    assert jnp.allclose(out, ref, atol=5e-2, rtol=5e-2), "mismatch vs reference"

    print("KERNEL_OK")
</pallas_src>

<mosaic_0001>
module attributes {stable_mosaic.version = 11 : i64} {
  func.func @_mlp_kernel_acc_in_out(%arg0: i32, %arg1: i32, %arg2: memref<16x128xf32, #tpu.memory_space<vmem>>, %arg3: memref<128x128xbf16, #tpu.memory_space<vmem>>, %arg4: memref<128x128xbf16, #tpu.memory_space<vmem>>, %arg5: memref<1x128xf32, #tpu.memory_space<vmem>>, %arg6: memref<16x128xf32, #tpu.memory_space<vmem>>) attributes {dimension_semantics = [#tpu.dimension_semantics<parallel>, #tpu.dimension_semantics<arbitrary>], iteration_bounds = array<i64: 1, 1>, scalar_prefetch = 0 : i64, scratch_operands = 0 : i64, tpu.core_type = #tpu.core_type<tc>, window_params = [{transform_indices = @transform_0, window_bounds = array<i64: 16, 128>}, {transform_indices = @transform_1, window_bounds = array<i64: 128, 128>}, {transform_indices = @transform_2, window_bounds = array<i64: 128, 128>}, {pipeline_mode = #tpu.pipeline_mode<synchronous>, transform_indices = @transform_3, window_bounds = array<i64: 1, 128>}, {transform_indices = @transform_4, window_bounds = array<i64: 16, 128>}]} {
    %c0_i32 = arith.constant 0 : i32
    %0 = arith.cmpi eq, %arg1, %c0_i32 : i32
    %1 = arith.extui %0 : i1 to i32
    %c0_i32_0 = arith.constant 0 : i32
    %2 = arith.cmpi ne, %1, %c0_i32_0 : i32
    scf.if %2 {
      %cst_13 = arith.constant 0.000000e+00 : f32
      %16 = vector.broadcast %cst_13 : f32 to vector<16x128xf32>
      %c0_14 = arith.constant 0 : index
      %c0_15 = arith.constant 0 : index
      %17 = vector.load %arg6[%c0_14, %c0_15] : memref<16x128xf32, #tpu.memory_space<vmem>>, vector<16x128xf32>
      tpu.vector_store %arg6[%c0_14, %c0_15], %16 {strides = array<i32>} : memref<16x128xf32, #tpu.memory_space<vmem>>, vector<16x128xf32>,
    } else {
    }
    %c0 = arith.constant 0 : index
    %c0_1 = arith.constant 0 : index
    %3 = vector.load %arg2[%c0, %c0_1] : memref<16x128xf32, #tpu.memory_space<vmem>>, vector<16x128xf32>
    %4 = arith.truncf %3 : vector<16x128xf32> to vector<16x128xbf16>
    %c0_2 = arith.constant 0 : index
    %c0_3 = arith.constant 0 : index
    %5 = vector.load %arg3[%c0_2, %c0_3] : memref<128x128xbf16, #tpu.memory_space<vmem>>, vector<128x128xbf16>
    %cst = arith.constant dense<0.000000e+00> : vector<16x128xf32>
    %6 = tpu.matmul %4, %5, %cst {dimension_numbers = #tpu.dot_dimension_numbers<[1], [0], [0], [1], [0, 0, 1, 1], [], []>} : vector<16x128xbf16>, vector<128x128xbf16>, vector<16x128xf32> -> vector<16x128xf32>
    %c0_4 = arith.constant 0 : index
    %c0_5 = arith.constant 0 : index
    %7 = vector.load %arg6[%c0_4, %c0_5] : memref<16x128xf32, #tpu.memory_space<vmem>>, vector<16x128xf32>
    %8 = arith.truncf %6 : vector<16x128xf32> to vector<16x128xbf16>
    %c0_6 = arith.constant 0 : index
    %c0_7 = arith.constant 0 : index
    %9 = vector.load %arg4[%c0_6, %c0_7] : memref<128x128xbf16, #tpu.memory_space<vmem>>, vector<128x128xbf16>
    %cst_8 = arith.constant dense<0.000000e+00> : vector<16x128xf32>
    %10 = tpu.matmul %8, %9, %cst_8 {dimension_numbers = #tpu.dot_dimension_numbers<[1], [0], [0], [1], [0, 0, 1, 1], [], []>} : vector<16x128xbf16>, vector<128x128xbf16>, vector<16x128xf32> -> vector<16x128xf32>
    %11 = arith.addf %7, %10 : vector<16x128xf32>
    %c0_9 = arith.constant 0 : index
    %c0_10 = arith.constant 0 : index
    %12 = vector.load %arg6[%c0_9, %c0_10] : memref<16x128xf32, #tpu.memory_space<vmem>>, vector<16x128xf32>
    tpu.vector_store %arg6[%c0_9, %c0_10], %11 {strides = array<i32>} : memref<16x128xf32, #tpu.memory_space<vmem>>, vector<16x128xf32>,
    %c0_i32_11 = arith.constant 0 : i32
    %13 = arith.cmpi eq, %arg1, %c0_i32_11 : i32
    %14 = arith.extui %13 : i1 to i32
    %c0_i32_12 = arith.constant 0 : i32
    %15 = arith.cmpi ne, %14, %c0_i32_12 : i32
    scf.if %15 {
      %c0_13 = arith.constant 0 : index
      %c0_14 = arith.constant 0 : index
      %16 = vector.load %arg6[%c0_13, %c0_14] : memref<16x128xf32, #tpu.memory_space<vmem>>, vector<16x128xf32>
      %c0_15 = arith.constant 0 : index
      %c0_16 = arith.constant 0 : index
      %17 = vector.load %arg5[%c0_15, %c0_16] : memref<1x128xf32, #tpu.memory_space<vmem>>, vector<1x128xf32>
      %18 = vector.broadcast %17 : vector<1x128xf32> to vector<16x128xf32>
      %19 = arith.addf %16, %18 : vector<16x128xf32>
      %c0_17 = arith.constant 0 : index
      %c0_18 = arith.constant 0 : index
      %20 = vector.load %arg6[%c0_17, %c0_18] : memref<16x128xf32, #tpu.memory_space<vmem>>, vector<16x128xf32>
      tpu.vector_store %arg6[%c0_17, %c0_18], %19 {strides = array<i32>} : memref<16x128xf32, #tpu.memory_space<vmem>>, vector<16x128xf32>,
    } else {
    }
    return
  }
  func.func @transform_0(%arg0: i32, %arg1: i32) -> (i32, i32) {
    %c0_i32 = arith.constant 0 : i32
    %c0_i32_0 = arith.constant 0 : i32
    return %arg0, %c0_i32 : i32, i32
  }
  func.func @transform_1(%arg0: i32, %arg1: i32) -> (i32, i32) {
    %c0_i32 = arith.constant 0 : i32
    %c0_i32_0 = arith.constant 0 : i32
    return %c0_i32, %arg1 : i32, i32
  }
  func.func @transform_2(%arg0: i32, %arg1: i32) -> (i32, i32) {
    %c0_i32 = arith.constant 0 : i32
    %c0_i32_0 = arith.constant 0 : i32
    return %arg1, %c0_i32 : i32, i32
  }
  func.func @transform_3(%arg0: i32, %arg1: i32) -> (i32, i32) {
    %c0_i32 = arith.constant 0 : i32
    %c0_i32_0 = arith.constant 0 : i32
    %c0_i32_1 = arith.constant 0 : i32
    return %c0_i32, %c0_i32_0 : i32, i32
  }
  func.func @transform_4(%arg0: i32, %arg1: i32) -> (i32, i32) {
    %c0_i32 = arith.constant 0 : i32
    %c0_i32_0 = arith.constant 0 : i32
    return %arg0, %c0_i32 : i32, i32
  }
}

</mosaic_0001>

<llo_original>
// kernel: tpu_custom_call.1
$region0: #{tpu_custom_call.1}
  #allocation0 [shape = 'u32[]', space=smem, size = 0x4, offset = 0x4, fixed_abs, tag = 'smem constant byte address 0x4 - core index']
  #allocation1 [shape = 'u32[144,128]{1,0:T(1,128)}', space=vmem, size = 0x12000, scoped, tag = 'internal scratch']
  %s0 = inlined_call_operand.hbm [shape: f32[16,128], index: 0, kind: input, shape index: {}]
  %s1 = inlined_call_operand.hbm [shape: bf16[128,128], index: 1, kind: input, shape index: {}]
  %s2 = inlined_call_operand.hbm [shape: bf16[128,128], index: 2, kind: input, shape index: {}]
  %s3 = inlined_call_operand.vmem [shape: f32[1,128], index: 3, kind: input, shape index: {}]
  %s4 = inlined_call_operand.hbm [shape: f32[16,128], index: 4, kind: output, shape index: {}]
  %s5 = sld [smem:[#allocation0]]
  $region46: #{tpu_custom_call.1} parent=0
    _
  %s7 = ssub.s32 1, %s5
  %s8 = scalar_select 0, %s7, %s5
  $region1: #{tpu_custom_call.1} parent=0
    #allocation2 [shape = 'u8[8192]{0}', space=vmem, size = 0x2000, scoped, tag = 'input window, operand 0, single buffered']
    #allocation3 [shape = 's32[1]{0}', space=sflag, size = 0x4, scoped, tag = 'scoped memory for tpu_custom_call.1']
    #allocation4 [shape = 's32[1]{0}', space=sflag, size = 0x4, scoped, tag = 'scoped memory for tpu_custom_call.1']
    #allocation5 [shape = 'u8[32768]{0}', space=vmem, size = 0x8000, scoped, tag = 'input window, operand 1, single buffered']
    #allocation6 [shape = 's32[1]{0}', space=sflag, size = 0x4, scoped, tag = 'scoped memory for tpu_custom_call.1']
    #allocation7 [shape = 'u8[32768]{0}', space=vmem, size = 0x8000, scoped, tag = 'input window, operand 2, single buffered']
    #allocation8 [shape = 'u8[8192]{0}', space=vmem, size = 0x2000, scoped, tag = 'output window, operand 0, single buffered']
    %9 = vsyncpa [#allocation3], 0
    %10 = vsyncpa [#allocation6], 0
    %11 = vsyncpa [#allocation4], 0
    // Predicated region
    $region2: #{tpu_custom_call.1} parent=1 // pred_check
      _
    $region3: #{tpu_custom_call.1} parent=1 // pred_check_branch
      %13 = sbr.rel (0) target = $region5
    $region4: #{tpu_custom_call.1} parent=1 // pred_region
      %s15 = ssub.s32 256, 256
      %16 = vsyncadd [#allocation3], %s15
      %s17 = sshll.u32 [#allocation2], 4
      %s18 = int_to_ptr.vmem [resolvable:$true] %s17
      %23 = dma.hbm_to_vmem [thread:$0]  %s0, 256, %s18, [#allocation3], 128, 128, 8
    $region5: #{tpu_custom_call.1} parent=1 // pred_fallthru
      _
    // Predicated region
    $region6: #{tpu_custom_call.1} parent=1 // pred_check
      _
    $region7: #{tpu_custom_call.1} parent=1 // pred_check_branch
      %25 = sbr.rel (0) target = $region9
    $region8: #{tpu_custom_call.1} parent=1 // pred_region
      %s27 = ssub.s32 1024, 1024
      %28 = vsyncadd [#allocation6], %s27
      %s29 = sshll.u32 [#allocation5], 4
      %s30 = int_to_ptr.vmem [resolvable:$true] %s29
      %35 = dma.hbm_to_vmem [thread:$0]  %s1, 1024, %s30, [#allocation6], 64, 64, 4
    $region9: #{tpu_custom_call.1} parent=1 // pred_fallthru
      _
    // Predicated region
    $region10: #{tpu_custom_call.1} parent=1 // pred_check
      _
    $region11: #{tpu_custom_call.1} parent=1 // pred_check_branch
      %37 = sbr.rel (0) target = $region13
    $region12: #{tpu_custom_call.1} parent=1 // pred_region
      %s39 = ssub.s32 1024, 1024
      %40 = vsyncadd [#allocation6], %s39
      %s41 = sshll.u32 [#allocation7], 4
      %s42 = int_to_ptr.vmem [resolvable:$true] %s41
      %47 = dma.hbm_to_vmem [thread:$0]  %s2, 1024, %s42, [#allocation6], 64, 64, 4
    $region13: #{tpu_custom_call.1} parent=1 // pred_fallthru
      _
    // Predicated region
    $region14: #{tpu_custom_call.1} parent=1 // pred_check
      _
    $region15: #{tpu_custom_call.1} parent=1 // pred_check_branch
      %49 = sbr.rel (0) target = $region17
    $region16: #{tpu_custom_call.1} parent=1 // pred_region
      _
    $region17: #{tpu_custom_call.1} parent=1 // pred_fallthru
      _
    // Predicated region
    $region18: #{tpu_custom_call.1} parent=1 // pred_check
      _
    $region19: #{tpu_custom_call.1} parent=1 // pred_check_branch
      %51 = sbr.rel (0) target = $region21
    $region20: #{tpu_custom_call.1} parent=1 // pred_region
      %52 = dma.done [#allocation3], 256
    $region21: #{tpu_custom_call.1} parent=1 // pred_fallthru
      _
    // Predicated region
    $region22: #{tpu_custom_call.1} parent=1 // pred_check
      _
    $region23: #{tpu_custom_call.1} parent=1 // pred_check_branch
      %54 = sbr.rel (0) target = $region25
    $region24: #{tpu_custom_call.1} parent=1 // pred_region
      %55 = dma.done [#allocation6], 1024
    $region25: #{tpu_custom_call.1} parent=1 // pred_fallthru
      _
    // Predicated region
    $region26: #{tpu_custom_call.1} parent=1 // pred_check
      _
    $region27: #{tpu_custom_call.1} parent=1 // pred_check_branch
      %57 = sbr.rel (0) target = $region29
    $region28: #{tpu_custom_call.1} parent=1 // pred_region
      %58 = dma.done [#allocation6], 1024
    $region29: #{tpu_custom_call.1} parent=1 // pred_fallthru
      _
    %p60 = scmp.eq.s32.totalorder 0, 0
    // Predicated region
    $region30: #{tpu_custom_call.1} parent=1 // pred_check
      %p61 = pneg %p60
    $region31: #{tpu_custom_call.1} parent=1 // pred_check_branch
      %63 = sbr.rel (%p61) target = $region33
    $region32: #{tpu_custom_call.1} parent=1 // pred_region
      %64 = vst [vmem:[#allocation8] sm:$0xff] 0.0
      %65 = vst [vmem:[#allocation8 + $0x8] sm:$0xff] 0.0
    $region33: #{tpu_custom_call.1} parent=1 // pred_fallthru
      _
    %v66 = vld [vmem:[#allocation2] sm:$0xff]
    %v67 = vld [vmem:[#allocation2 + $0x8] sm:$0xff]
    %v68 = vpack.c.bf16 %v67, %v66
    %v69 = vld [vmem:[#allocation5] sm:$0xf]
    %v70 = vld [vmem:[#allocation5 + $0x4] sm:$0xf]
    %v71 = vld [vmem:[#allocation5 + $0x8] sm:$0xf]
    %v72 = vld [vmem:[#allocation5 + $0xc] sm:$0xf]
    %v73 = vld [vmem:[#allocation5 + $0x10] sm:$0xf]
    %v74 = vld [vmem:[#allocation5 + $0x14] sm:$0xf]
    %v75 = vld [vmem:[#allocation5 + $0x18] sm:$0xf]
    %v76 = vld [vmem:[#allocation5 + $0x1c] sm:$0xf]
    %v77 = vld [vmem:[#allocation5 + $0x20] sm:$0xf]
    %v78 = vld [vmem:[#allocation5 + $0x24] sm:$0xf]
    %v79 = vld [vmem:[#allocation5 + $0x28] sm:$0xf]
    %v80 = vld [vmem:[#allocation5 + $0x2c] sm:$0xf]
    %v81 = vld [vmem:[#allocation5 + $0x30] sm:$0xf]
    %v82 = vld [vmem:[#allocation5 + $0x34] sm:$0xf]
    %v83 = vld [vmem:[#allocation5 + $0x38] sm:$0xf]
    %v84 = vld [vmem:[#allocation5 + $0x3c] sm:$0xf]
    %v101 = vunpack.c.l.b16 %v69
    %v102 = vunpack.c.l.b16 %v70
    %v103 = vunpack.c.l.b16 %v71
    %v104 = vunpack.c.l.b16 %v72
    %v105 = vunpack.c.l.b16 %v73
    %v106 = vunpack.c.l.b16 %v74
    %v107 = vunpack.c.l.b16 %v75
    %v108 = vunpack.c.l.b16 %v76
    %v109 = vunpack.c.l.b16 %v77
    %v110 = vunpack.c.l.b16 %v78
    %v111 = vunpack.c.l.b16 %v79
    %v112 = vunpack.c.l.b16 %v80
    %v113 = vunpack.c.l.b16 %v81
    %v114 = vunpack.c.l.b16 %v82
    %v115 = vunpack.c.l.b16 %v83
    %v116 = vunpack.c.l.b16 %v84
    %v117 = vpack.c.b16 %v102, %v101
    %v118 = vpack.c.b16 %v104, %v103
    %v119 = vpack.c.b16 %v106, %v105
    %v120 = vpack.c.b16 %v108, %v107
    %v121 = vpack.c.b16 %v110, %v109
    %v122 = vpack.c.b16 %v112, %v111
    %v123 = vpack.c.b16 %v114, %v113
    %v124 = vpack.c.b16 %v116, %v115
    %133 = vmatprep.subr.bf16.mxu0 0
    %134 = vmatpush1.bf16.msra.mxu0 %v117
    %135 = vmatprep.subr.bf16.mxu0 0
    %136 = vmatpush1.bf16.msra.mxu0 %v118
    %137 = vmatprep.subr.bf16.mxu0 0
    %138 = vmatpush1.bf16.msra.mxu0 %v119
    %139 = vmatprep.subr.bf16.mxu0 0
    %140 = vmatpush1.bf16.msra.mxu0 %v120
    %141 = vmatprep.subr.bf16.mxu0 0
    %142 = vmatpush1.bf16.msra.mxu0 %v121
    %143 = vmatprep.subr.bf16.mxu0 0
    %144 = vmatpush1.bf16.msra.mxu0 %v122
    %145 = vmatprep.subr.bf16.mxu0 0
    %146 = vmatpush1.bf16.msra.mxu0 %v123
    %147 = vmatprep.subr.bf16.mxu0 0
    %148 = vmatpush1.bf16.msra.mxu0 %v124
    %149 = vmatprep.subr.bf16.mxu0 0
    %150 = vmatpush1.bf16.msra.mxu0 0
    %151 = vmatprep.subr.bf16.mxu0 0
    %152 = vmatpush1.bf16.msra.mxu0 0
    %153 = vmatprep.subr.bf16.mxu0 0
    %154 = vmatpush1.bf16.msra.mxu0 0
    %155 = vmatprep.subr.bf16.mxu0 0
    %156 = vmatpush1.bf16.msra.mxu0 0
    %157 = vmatprep.subr.bf16.mxu0 0
    %158 = vmatpush1.bf16.msra.mxu0 0
    %159 = vmatprep.subr.bf16.mxu0 0
    %160 = vmatpush1.bf16.msra.mxu0 0
    %161 = vmatprep.subr.bf16.mxu0 0
    %162 = vmatpush1.bf16.msra.mxu0 0
    %163 = vmatprep.subr.bf16.mxu0 0
    %164 = vmatpush1.bf16.msra.mxu0 0
    %165 = vmatprep.mubr.bf16.mxu0 0
    %166 = vmatmul.mubr.bf16.gmra.mrb[0].mxu0 %v68
    %v167 = vpop.f32.mrb[0].mxu0
    %v168 = vadd.f32 0.0, %v167
    %v169 = vpop.f32.mrb[0].mxu0
    %v170 = vpop.f32.mrb[0].mxu0
    %v171 = vadd.f32 0.0, %v170
    %v172 = vpop.f32.mrb[0].mxu0
    %173 = vdwg.mxu0
    %v174 = vld [vmem:[#allocation8] sm:$0xff]
    %v175 = vld [vmem:[#allocation8 + $0x8] sm:$0xff]
    %v176 = vpack.c.bf16 %v171, %v168
    %v177 = vld [vmem:[#allocation7] sm:$0xf]
    %v178 = vld [vmem:[#allocation7 + $0x4] sm:$0xf]
    %v179 = vld [vmem:[#allocation7 + $0x8] sm:$0xf]
    %v180 = vld [vmem:[#allocation7 + $0xc] sm:$0xf]
    %v181 = vld [vmem:[#allocation7 + $0x10] sm:$0xf]
    %v182 = vld [vmem:[#allocation7 + $0x14] sm:$0xf]
    %v183 = vld [vmem:[#allocation7 + $0x18] sm:$0xf]
    %v184 = vld [vmem:[#allocation7 + $0x1c] sm:$0xf]
    %v185 = vld [vmem:[#allocation7 + $0x20] sm:$0xf]
    %v186 = vld [vmem:[#allocation7 + $0x24] sm:$0xf]
    %v187 = vld [vmem:[#allocation7 + $0x28] sm:$0xf]
    %v188 = vld [vmem:[#allocation7 + $0x2c] sm:$0xf]
    %v189 = vld [vmem:[#allocation7 + $0x30] sm:$0xf]
    %v190 = vld [vmem:[#allocation7 + $0x34] sm:$0xf]
    %v191 = vld [vmem:[#allocation7 + $0x38] sm:$0xf]
    %v192 = vld [vmem:[#allocation7 + $0x3c] sm:$0xf]
    %v209 = vunpack.c.l.b16 %v177
    %v210 = vunpack.c.l.b16 %v178
    %v211 = vunpack.c.l.b16 %v179
    %v212 = vunpack.c.l.b16 %v180
    %v213 = vunpack.c.l.b16 %v181
    %v214 = vunpack.c.l.b16 %v182
    %v215 = vunpack.c.l.b16 %v183
    %v216 = vunpack.c.l.b16 %v184
    %v217 = vunpack.c.l.b16 %v185
    %v218 = vunpack.c.l.b16 %v186
    %v219 = vunpack.c.l.b16 %v187
    %v220 = vunpack.c.l.b16 %v188
    %v221 = vunpack.c.l.b16 %v189
    %v222 = vunpack.c.l.b16 %v190
    %v223 = vunpack.c.l.b16 %v191
    %v224 = vunpack.c.l.b16 %v192
    %v225 = vpack.c.b16 %v210, %v209
    %v226 = vpack.c.b16 %v212, %v211
    %v227 = vpack.c.b16 %v214, %v213
    %v228 = vpack.c.b16 %v216, %v215
    %v229 = vpack.c.b16 %v218, %v217
    %v230 = vpack.c.b16 %v220, %v219
    %v231 = vpack.c.b16 %v222, %v221
    %v232 = vpack.c.b16 %v224, %v223
    %241 = vmatprep.subr.bf16.mxu0 0
    %242 = vmatpush1.bf16.msra.mxu0 %v225
    %243 = vmatprep.subr.bf16.mxu0 0
    %244 = vmatpush1.bf16.msra.mxu0 %v226
    %245 = vmatprep.subr.bf16.mxu0 0
    %246 = vmatpush1.bf16.msra.mxu0 %v227
    %247 = vmatprep.subr.bf16.mxu0 0
    %248 = vmatpush1.bf16.msra.mxu0 %v228
    %249 = vmatprep.subr.bf16.mxu0 0
    %250 = vmatpush1.bf16.msra.mxu0 %v229
    %251 = vmatprep.subr.bf16.mxu0 0
    %252 = vmatpush1.bf16.msra.mxu0 %v230
    %253 = vmatprep.subr.bf16.mxu0 0
    %254 = vmatpush1.bf16.msra.mxu0 %v231
    %255 = vmatprep.subr.bf16.mxu0 0
    %256 = vmatpush1.bf16.msra.mxu0 %v232
    %257 = vmatprep.subr.bf16.mxu0 0
    %258 = vmatpush1.bf16.msra.mxu0 0
    %259 = vmatprep.subr.bf16.mxu0 0
    %260 = vmatpush1.bf16.msra.mxu0 0
    %261 = vmatprep.subr.bf16.mxu0 0
    %262 = vmatpush1.bf16.msra.mxu0 0
    %263 = vmatprep.subr.bf16.mxu0 0
    %264 = vmatpush1.bf16.msra.mxu0 0
    %265 = vmatprep.subr.bf16.mxu0 0
    %266 = vmatpush1.bf16.msra.mxu0 0
    %267 = vmatprep.subr.bf16.mxu0 0
    %268 = vmatpush1.bf16.msra.mxu0 0
    %269 = vmatprep.subr.bf16.mxu0 0
    %270 = vmatpush1.bf16.msra.mxu0 0
    %271 = vmatprep.subr.bf16.mxu0 0
    %272 = vmatpush1.bf16.msra.mxu0 0
    %273 = vmatprep.mubr.bf16.mxu0 0
    %274 = vmatmul.mubr.bf16.gmra.mrb[0].mxu0 %v176
    %v275 = vpop.f32.mrb[0].mxu0
    %v276 = vadd.f32 0.0, %v275
    %v277 = vpop.f32.mrb[0].mxu0
    %v278 = vpop.f32.mrb[0].mxu0
    %v279 = vadd.f32 0.0, %v278
    %v280 = vpop.f32.mrb[0].mxu0
    %281 = vdwg.mxu0
    %v282 = vadd.f32 %v174, %v276
    %v283 = vadd.f32 %v175, %v279
    %284 = vst [vmem:[#allocation8] sm:$0xff] %v282
    %285 = vst [vmem:[#allocation8 + $0x8] sm:$0xff] %v283
    // Predicated region
    $region34: #{tpu_custom_call.1} parent=1 // pred_check
      %p286 = pneg %p60
    $region35: #{tpu_custom_call.1} parent=1 // pred_check_branch
      %288 = sbr.rel (%p286) target = $region37
    $region36: #{tpu_custom_call.1} parent=1 // pred_region
      %v289 = vld [vmem:[#allocation8] sm:$0xff]
      %v290 = vld [vmem:[#allocation8 + $0x8] sm:$0xff]
      %v291 = vld [vmem:[%s3] sm:$0x1]
      %v293 = vlaneseq
      %v294 = vshrl.u32 %v293, 7
      %v295 = vsub.s32 0, %v294
      %v296 = vrot.slane %v291, %v295
      %v298 = vadd.f32 %v289, %v296
      %v299 = vadd.f32 %v290, %v296
      %300 = vst [vmem:[#allocation8] sm:$0xff] %v298
      %301 = vst [vmem:[#allocation8 + $0x8] sm:$0xff] %v299
    $region37: #{tpu_custom_call.1} parent=1 // pred_fallthru
      _
    // Predicated region
    $region38: #{tpu_custom_call.1} parent=1 // pred_check
      _
    $region39: #{tpu_custom_call.1} parent=1 // pred_check_branch
      %303 = sbr.rel (0) target = $region41
    $region40: #{tpu_custom_call.1} parent=1 // pred_region
      %s305 = ssub.s32 256, 256
      %306 = vsyncadd [#allocation4], %s305
      %s307 = sshll.u32 [#allocation8], 4
      %s308 = int_to_ptr.vmem [resolvable:$true] %s307
      %313 = dma.vmem_to_hbm [thread:$0]  %s308, 256, %s4, [#allocation4], 128, 128, 8
    $region41: #{tpu_custom_call.1} parent=1 // pred_fallthru
      _
    // Predicated region
    $region42: #{tpu_custom_call.1} parent=1 // pred_check
      _
    $region43: #{tpu_custom_call.1} parent=1 // pred_check_branch
      %315 = sbr.rel (0) target = $region45
    $region44: #{tpu_custom_call.1} parent=1 // pred_region
      %316 = dma.done [#allocation4], 256
    $region45: #{tpu_custom_call.1} parent=1 // pred_fallthru
      _
    %317 = vsyncpa [#allocation3], 1
    %318 = vsyncpa [#allocation6], 1
    %319 = vsyncpa [#allocation4], 1

</llo_original>
